<compile_context>
chip_gen: v7x
topology: tpu7x:2x2x1
jax: 0.10.0
libtpu: 0.0.40
codegen_flags: <defaults>
</compile_context>

<pallas_src>
import functools

import jax
import jax.numpy as jnp
from jax.experimental import pallas as pl
from jax.experimental.pallas import tpu as pltpu


def _mlp_kernel(x_ref, w1_ref, b1_ref, w2_ref, b2_ref, o_ref):
    # relu(x @ W1' + b1') @ W2 + b2, MXU matmuls with f32 accumulation.
    h = jnp.dot(x_ref[...], w1_ref[...], preferred_element_type=jnp.float32)
    h = jnp.maximum(h + b1_ref[...], 0.0)
    out = jnp.dot(h.astype(w2_ref.dtype), w2_ref[...],
                  preferred_element_type=jnp.float32)
    o_ref[...] = (out + b2_ref[...]).astype(o_ref.dtype)


def _round_up(n, m):
    return ((n + m - 1) // m) * m


def _resident_spec(shape):
    """BlockSpec for an operand that is identical on every grid step."""
    try:
        # Single-buffered: constant index_map means the block is fetched once;
        # no need for a second VMEM copy.
        return pl.BlockSpec(shape, lambda i: (0, 0),
                            pipeline_mode=pl.Buffered(1))
    except TypeError:
        # Older jax without pipeline_mode on BlockSpec: fall back to default.
        return pl.BlockSpec(shape, lambda i: (0, 0))


@functools.partial(jax.jit, static_argnames=("max_tile_b", "compute_dtype"))
def scaled_model_forward(x, mean, std, w1, b1, w2, b2, *,
                         max_tile_b=512, compute_dtype=None):
    """forward(x) = relu(((x - mean)/std) @ w1 + b1) @ w2 + b2, fused."""
    B, F = x.shape
    H = w1.shape[1]
    O = w2.shape[1]
    out_dtype = x.dtype

    # ---- Fold the scaler into the first linear layer (wrapper-side, cheap) --
    # ((x - mean)/std) @ W1 + b1 == x @ (W1/std[:,None]) + (b1 - (mean/std)@W1)
    # eps guard so a zero-variance feature doesn't poison W1'/b1' with inf/NaN.
    std_safe = jnp.maximum(std.astype(jnp.float32), 1e-12)
    inv_std = 1.0 / std_safe
    w1_eff = w1.astype(jnp.float32) * inv_std[:, None]
    b1_eff = (b1.astype(jnp.float32)
              - (mean.astype(jnp.float32) * inv_std) @ w1.astype(jnp.float32))
    w2_eff = w2.astype(jnp.float32)
    b2_eff = b2.astype(jnp.float32)

    # ---- Pad the hidden dim to a lane-dense multiple of 128 (HBM-free:
    #      these operands are resident; zero columns/rows are exact). ---------
    H_pad = _round_up(H, 128)
    if H_pad != H:
        w1_eff = jnp.pad(w1_eff, ((0, 0), (0, H_pad - H)))
        b1_eff = jnp.pad(b1_eff, ((0, H_pad - H),))
        w2_eff = jnp.pad(w2_eff, ((0, H_pad - H), (0, 0)))
    # TODO(synk): O < 128 still produces masked output stores; if profiling
    # shows the store slot dominating, present a lane-dense (tile_b/4, 4*O)
    # output slab and reshape in the wrapper (pure metadata reshape).

    # Only the *resident* weights are optionally cast; x is streamed as-is
    # (a wrapper-side astype of x would add a full extra pass over HBM).
    if compute_dtype is not None:
        w1_eff = w1_eff.astype(compute_dtype)
        w2_eff = w2_eff.astype(compute_dtype)

    # Biases as (1, N) rows: sublane=1, lanes=feature axis.
    b1_2 = b1_eff.reshape(1, H_pad)
    b2_2 = b2_eff.reshape(1, O)

    # ---- Batch tiling: no padding of x; ragged last block handled by Pallas.
    # Keep >= 2 grid steps for moderately large B so v7x's two TensorCores are
    # both used ("parallel" semantics); negligible overhead on v5e/v6e.
    if B < 128:
        ntiles = 1
    else:
        ntiles = max(2, pl.cdiv(B, max_tile_b))
    tile_b = _round_up(pl.cdiv(B, ntiles), 8)
    grid = (pl.cdiv(B, tile_b),)

    # ---- VMEM budget: streamed x/out double-buffered, weights single copy. --
    x_isz = jnp.dtype(x.dtype).itemsize
    o_isz = jnp.dtype(out_dtype).itemsize
    w_isz = jnp.dtype(w1_eff.dtype).itemsize
    vmem_need = (2 * tile_b * F * x_isz          # x tiles (double-buffered)
                 + 2 * tile_b * O * o_isz        # out tiles (double-buffered)
                 + (F * H_pad + H_pad * O) * w_isz   # resident weights (x1)
                 + (H_pad + O) * 4               # biases
                 + tile_b * H_pad * 4)           # relu intermediate
    vmem_limit = int(min(max(2 * vmem_need, 16 * 2**20), 64 * 2**20))

    cost = pl.CostEstimate(
        flops=2 * B * F * H_pad + 2 * B * H_pad * O,
        transcendentals=0,
        bytes_accessed=(B * F * x_isz + B * O * o_isz
                        + (F * H_pad + H_pad * O) * w_isz + (H_pad + O) * 4),
    )

    out = pl.pallas_call(
        _mlp_kernel,
        out_shape=jax.ShapeDtypeStruct((B, O), out_dtype),
        grid_spec=pltpu.PrefetchScalarGridSpec(
            num_scalar_prefetch=0,
            grid=grid,
            in_specs=[
                pl.BlockSpec((tile_b, F), lambda i: (i, 0)),   # x tile (streamed)
                _resident_spec((F, H_pad)),                    # W1' (resident)
                _resident_spec((1, H_pad)),                    # b1'
                _resident_spec((H_pad, O)),                    # W2
                _resident_spec((1, O)),                        # b2
            ],
            out_specs=pl.BlockSpec((tile_b, O), lambda i: (i, 0)),
        ),
        compiler_params=pltpu.CompilerParams(
            dimension_semantics=("parallel",),
            vmem_limit_bytes=vmem_limit,
        ),
        cost_estimate=cost,
    )(x, w1_eff, b1_2, w2_eff, b2_2)

    return out


def _reference(x, mean, std, w1, b1, w2, b2):
    xs = (x - mean) / std
    h = jnp.maximum(xs @ w1 + b1, 0.0)
    return h @ w2 + b2


if __name__ == "__main__":
    B, F, H, O = 16, 32, 64, 32  # small shapes consistent with the wrapper

    key = jax.random.PRNGKey(0)
    kx, km, ks, kw1, kb1, kw2, kb2 = jax.random.split(key, 7)

    x = jax.random.normal(kx, (B, F), dtype=jnp.float32)

    # deterministic "scaler" statistics and MLP parameters
    mean = jax.random.normal(km, (F,), dtype=jnp.float32) * 0.5
    std = jax.random.uniform(ks, (F,), dtype=jnp.float32, minval=0.5, maxval=1.5)
    w1 = jax.random.normal(kw1, (F, H), dtype=jnp.float32) * (1.0 / jnp.sqrt(F))
    b1 = jax.random.normal(kb1, (H,), dtype=jnp.float32) * 0.1
    w2 = jax.random.normal(kw2, (H, O), dtype=jnp.float32) * (1.0 / jnp.sqrt(H))
    b2 = jax.random.normal(kb2, (O,), dtype=jnp.float32) * 0.1

    out = jax.block_until_ready(scaled_model_forward(x, mean, std, w1, b1, w2, b2))
    ref = _reference(x, mean, std, w1, b1, w2, b2)
    assert out.shape == (B, O)
    assert jnp.allclose(out, ref, atol=1e-4, rtol=1e-4), "mismatch vs reference"

    # Non-tile-divisible batch: exercises the ragged final grid block (no pad).
    x_odd = jax.random.normal(kx, (B + 5, F), dtype=jnp.float32)
    out_odd = jax.block_until_ready(
        scaled_model_forward(x_odd, mean, std, w1, b1, w2, b2))
    ref_odd = _reference(x_odd, mean, std, w1, b1, w2, b2)
    assert out_odd.shape == (B + 5, O)
    assert jnp.allclose(out_odd, ref_odd, atol=1e-4, rtol=1e-4), "ragged-batch mismatch"

    print("KERNEL_OK")
</pallas_src>

<mosaic_0001>
module attributes {stable_mosaic.version = 11 : i64} {
  func.func @_mlp_kernel(%arg0: i32, %arg1: memref<16x32xf32, #tpu.memory_space<vmem>>, %arg2: memref<32x128xf32, #tpu.memory_space<vmem>>, %arg3: memref<1x128xf32, #tpu.memory_space<vmem>>, %arg4: memref<128x32xf32, #tpu.memory_space<vmem>>, %arg5: memref<1x32xf32, #tpu.memory_space<vmem>>, %arg6: memref<16x32xf32, #tpu.memory_space<vmem>>) attributes {dimension_semantics = [#tpu.dimension_semantics<parallel>], iteration_bounds = array<i64: 1>, scalar_prefetch = 0 : i64, scratch_operands = 0 : i64, tpu.core_type = #tpu.core_type<tc>, window_params = [{transform_indices = @transform_0, window_bounds = array<i64: 16, 32>}, {pipeline_mode = #tpu.pipeline_mode<synchronous>, transform_indices = @transform_1, window_bounds = array<i64: 32, 128>}, {pipeline_mode = #tpu.pipeline_mode<synchronous>, transform_indices = @transform_2, window_bounds = array<i64: 1, 128>}, {pipeline_mode = #tpu.pipeline_mode<synchronous>, transform_indices = @transform_3, window_bounds = array<i64: 128, 32>}, {pipeline_mode = #tpu.pipeline_mode<synchronous>, transform_indices = @transform_4, window_bounds = array<i64: 1, 32>}, {transform_indices = @transform_5, window_bounds = array<i64: 16, 32>}]} {
    %c0 = arith.constant 0 : index
    %c0_0 = arith.constant 0 : index
    %0 = vector.load %arg1[%c0, %c0_0] : memref<16x32xf32, #tpu.memory_space<vmem>>, vector<16x32xf32>
    %c0_1 = arith.constant 0 : index
    %c0_2 = arith.constant 0 : index
    %1 = vector.load %arg2[%c0_1, %c0_2] : memref<32x128xf32, #tpu.memory_space<vmem>>, vector<32x128xf32>
    %cst = arith.constant dense<0.000000e+00> : vector<16x128xf32>
    %2 = tpu.matmul %0, %1, %cst {dimension_numbers = #tpu.dot_dimension_numbers<[1], [0], [0], [1], [0, 0, 1, 1], [], []>} : vector<16x32xf32>, vector<32x128xf32>, vector<16x128xf32> -> vector<16x128xf32>
    %c0_3 = arith.constant 0 : index
    %c0_4 = arith.constant 0 : index
    %3 = vector.load %arg3[%c0_3, %c0_4] : memref<1x128xf32, #tpu.memory_space<vmem>>, vector<1x128xf32>
    %4 = vector.broadcast %3 : vector<1x128xf32> to vector<16x128xf32>
    %5 = arith.addf %2, %4 : vector<16x128xf32>
    %cst_5 = arith.constant 0.000000e+00 : f32
    %6 = vector.broadcast %cst_5 : f32 to vector<16x128xf32>
    %7 = arith.maximumf %5, %6 : vector<16x128xf32>
    %c0_6 = arith.constant 0 : index
    %c0_7 = arith.constant 0 : index
    %8 = vector.load %arg4[%c0_6, %c0_7] : memref<128x32xf32, #tpu.memory_space<vmem>>, vector<128x32xf32>
    %cst_8 = arith.constant dense<0.000000e+00> : vector<16x32xf32>
    %9 = tpu.matmul %7, %8, %cst_8 {dimension_numbers = #tpu.dot_dimension_numbers<[1], [0], [0], [1], [0, 0, 1, 1], [], []>} : vector<16x128xf32>, vector<128x32xf32>, vector<16x32xf32> -> vector<16x32xf32>
    %c0_9 = arith.constant 0 : index
    %c0_10 = arith.constant 0 : index
    %10 = vector.load %arg5[%c0_9, %c0_10] : memref<1x32xf32, #tpu.memory_space<vmem>>, vector<1x32xf32>
    %11 = vector.broadcast %10 : vector<1x32xf32> to vector<16x32xf32>
    %12 = arith.addf %9, %11 : vector<16x32xf32>
    %c0_11 = arith.constant 0 : index
    %c0_12 = arith.constant 0 : index
    %13 = vector.load %arg6[%c0_11, %c0_12] : memref<16x32xf32, #tpu.memory_space<vmem>>, vector<16x32xf32>
    tpu.vector_store %arg6[%c0_11, %c0_12], %12 {strides = array<i32>} : memref<16x32xf32, #tpu.memory_space<vmem>>, vector<16x32xf32>,
    return
  }
  func.func @transform_0(%arg0: i32) -> (i32, i32) {
    %c0_i32 = arith.constant 0 : i32
    %c0_i32_0 = arith.constant 0 : i32
    return %arg0, %c0_i32 : i32, i32
  }
  func.func @transform_1(%arg0: i32) -> (i32, i32) {
    %c0_i32 = arith.constant 0 : i32
    %c0_i32_0 = arith.constant 0 : i32
    %c0_i32_1 = arith.constant 0 : i32
    return %c0_i32, %c0_i32_0 : i32, i32
  }
  func.func @transform_2(%arg0: i32) -> (i32, i32) {
    %c0_i32 = arith.constant 0 : i32
    %c0_i32_0 = arith.constant 0 : i32
    %c0_i32_1 = arith.constant 0 : i32
    return %c0_i32, %c0_i32_0 : i32, i32
  }
  func.func @transform_3(%arg0: i32) -> (i32, i32) {
    %c0_i32 = arith.constant 0 : i32
    %c0_i32_0 = arith.constant 0 : i32
    %c0_i32_1 = arith.constant 0 : i32
    return %c0_i32, %c0_i32_0 : i32, i32
  }
  func.func @transform_4(%arg0: i32) -> (i32, i32) {
    %c0_i32 = arith.constant 0 : i32
    %c0_i32_0 = arith.constant 0 : i32
    %c0_i32_1 = arith.constant 0 : i32
    return %c0_i32, %c0_i32_0 : i32, i32
  }
  func.func @transform_5(%arg0: i32) -> (i32, i32) {
    %c0_i32 = arith.constant 0 : i32
    %c0_i32_0 = arith.constant 0 : i32
    return %arg0, %c0_i32 : i32, i32
  }
}

</mosaic_0001>

<llo_original>
// kernel: sub.1
$region0: #{sub.1}
  #allocation0 [shape = 's32[1]{0}', space=sflag, size = 0x4, scoped, tag = 'scoped memory for sub.1']
  %s0 = inlined_call_operand.vmem [shape: f32[64], index: 0, kind: input, shape index: {}]
  %s1 = inlined_call_operand.vmem [shape: f32[64], index: 1, kind: input, shape index: {}]
  %s2 = inlined_call_operand.vmem [shape: f32[64], index: 2, kind: output, shape index: {}]
  %v3 = vld [vmem:[%s0] sm:$0x1]
  %v4 = vld [vmem:[%s1] sm:$0x1]
  %5 = xla_tuple %v3, %v4
  %6 = xla_tuple %5
  %v7 = vsub.f32 %v3, %v4
  %8 = xla_tuple %v7
  %9 = vst [vmem:[%s2] sm:$0x1] %v7

// kernel: scaled_model_forward.1
$region0: #{scaled_model_forward.1}
  #allocation0 [shape = 'u32[]', space=smem, size = 0x4, offset = 0x4, fixed_abs, tag = 'smem constant byte address 0x4 - core index']
  #allocation1 [shape = 'u32[144,128]{1,0:T(1,128)}', space=vmem, size = 0x12000, scoped, tag = 'internal scratch']
  %s0 = inlined_call_operand.vmem [shape: f32[16,32], index: 0, kind: input, shape index: {}]
  %s1 = inlined_call_operand.vmem [shape: f32[32,128], index: 1, kind: input, shape index: {}]
  %s2 = inlined_call_operand.vmem [shape: f32[1,128], index: 2, kind: input, shape index: {}]
  %s3 = inlined_call_operand.vmem [shape: f32[128,32], index: 3, kind: input, shape index: {}]
  %s4 = inlined_call_operand.vmem [shape: f32[1,32], index: 4, kind: input, shape index: {}]
  %s5 = inlined_call_operand.hbm [shape: f32[16,32], index: 5, kind: output, shape index: {}]
  %s6 = sld [smem:[#allocation0]]
  $region30: #{scaled_model_forward.1} parent=0
    _
  %s8 = ssub.s32 1, %s6
  %s9 = scalar_select 0, %s8, %s6
  $region1: #{scaled_model_forward.1} parent=0
    #allocation2 [shape = 'u8[8192]{0}', space=vmem, size = 0x2000, scoped, tag = 'output window, operand 0, single buffered']
    #allocation3 [shape = 's32[1]{0}', space=sflag, size = 0x4, scoped, tag = 'scoped memory for scaled_model_forward.1']
    %10 = vsyncpa [#allocation3], 0
    // Predicated region
    $region2: #{scaled_model_forward.1} parent=1 // pred_check
      _
    $region3: #{scaled_model_forward.1} parent=1 // pred_check_branch
      %12 = sbr.rel (0) target = $region5
    $region4: #{scaled_model_forward.1} parent=1 // pred_region
      _
    $region5: #{scaled_model_forward.1} parent=1 // pred_fallthru
      _
    // Predicated region
    $region6: #{scaled_model_forward.1} parent=1 // pred_check
      _
    $region7: #{scaled_model_forward.1} parent=1 // pred_check_branch
      %14 = sbr.rel (0) target = $region9
    $region8: #{scaled_model_forward.1} parent=1 // pred_region
      _
    $region9: #{scaled_model_forward.1} parent=1 // pred_fallthru
      _
    // Predicated region
    $region10: #{scaled_model_forward.1} parent=1 // pred_check
      _
    $region11: #{scaled_model_forward.1} parent=1 // pred_check_branch
      %16 = sbr.rel (0) target = $region13
    $region12: #{scaled_model_forward.1} parent=1 // pred_region
      _
    $region13: #{scaled_model_forward.1} parent=1 // pred_fallthru
      _
    // Predicated region
    $region14: #{scaled_model_forward.1} parent=1 // pred_check
      _
    $region15: #{scaled_model_forward.1} parent=1 // pred_check_branch
      %18 = sbr.rel (0) target = $region17
    $region16: #{scaled_model_forward.1} parent=1 // pred_region
      _
    $region17: #{scaled_model_forward.1} parent=1 // pred_fallthru
      _
    // Predicated region
    $region18: #{scaled_model_forward.1} parent=1 // pred_check
      _
    $region19: #{scaled_model_forward.1} parent=1 // pred_check_branch
      %20 = sbr.rel (0) target = $region21
    $region20: #{scaled_model_forward.1} parent=1 // pred_region
      _
    $region21: #{scaled_model_forward.1} parent=1 // pred_fallthru
      _
    %v21 = vld [vmem:[%s0] sm:$0xff]
    %v22 = vld [vmem:[%s0 + $0x8] sm:$0xff]
    %v23 = vld [vmem:[%s1] sm:$0xff]
    %v24 = vld [vmem:[%s1 + $0x8] sm:$0xff]
    %v25 = vld [vmem:[%s1 + $0x10] sm:$0xff]
    %v26 = vld [vmem:[%s1 + $0x18] sm:$0xff]
    %v27 = vld [vmem:[%s2] sm:$0x1]
    %v29 = vlaneseq
    %v30 = vshrl.u32 %v29, 7
    %v31 = vsub.s32 0, %v30
    %v32 = vrot.slane %v27, %v31
    %vm34 = vcmask 261120
    %v36 = vsel %vm34, %v21, 0
    %v39 = vsel %vm34, %v22, 0
    %41 = vmatprep.subr.mxu0 0.0
    %42 = vmatpush1.msra.mxu0 %v23
    %43 = vmatprep.subr.mxu0 0.0
    %44 = vmatpush1.msra.mxu0 %v24
    %45 = vmatprep.subr.mxu0 0.0
    %46 = vmatpush1.msra.mxu0 %v25
    %47 = vmatprep.subr.mxu0 0.0
    %48 = vmatpush1.msra.mxu0 %v26
    %49 = vmatprep.subr.mxu0 0.0
    %50 = vmatpush1.msra.mxu0 0.0
    %51 = vmatprep.subr.mxu0 0.0
    %52 = vmatpush1.msra.mxu0 0.0
    %53 = vmatprep.subr.mxu0 0.0
    %54 = vmatpush1.msra.mxu0 0.0
    %55 = vmatprep.subr.mxu0 0.0
    %56 = vmatpush1.msra.mxu0 0.0
    %57 = vmatprep.subr.mxu0 0.0
    %58 = vmatpush1.msra.mxu0 0.0
    %59 = vmatprep.subr.mxu0 0.0
    %60 = vmatpush1.msra.mxu0 0.0
    %61 = vmatprep.subr.mxu0 0.0
    %62 = vmatpush1.msra.mxu0 0.0
    %63 = vmatprep.subr.mxu0 0.0
    %64 = vmatpush1.msra.mxu0 0.0
    %65 = vmatprep.subr.mxu0 0.0
    %66 = vmatpush1.msra.mxu0 0.0
    %67 = vmatprep.subr.mxu0 0.0
    %68 = vmatpush1.msra.mxu0 0.0
    %69 = vmatprep.subr.mxu0 0.0
    %70 = vmatpush1.msra.mxu0 0.0
    %71 = vmatprep.subr.mxu0 0.0
    %72 = vmatpush1.msra.mxu0 0.0
    %73 = vmatprep.subr.mxu0 0.0
    %74 = vmatpush1.msra.mxu0 0.0
    %75 = vmatprep.subr.mxu0 0.0
    %76 = vmatpush1.msra.mxu0 0.0
    %77 = vmatprep.subr.mxu0 0.0
    %78 = vmatpush1.msra.mxu0 0.0
    %79 = vmatprep.subr.mxu0 0.0
    %80 = vmatpush1.msra.mxu0 0.0
    %81 = vmatprep.subr.mxu0 0.0
    %82 = vmatpush1.msra.mxu0 0.0
    %83 = vmatprep.subr.mxu0 0.0
    %84 = vmatpush1.msra.mxu0 0.0
    %85 = vmatprep.subr.mxu0 0.0
    %86 = vmatpush1.msra.mxu0 0.0
    %87 = vmatprep.subr.mxu0 0.0
    %88 = vmatpush1.msra.mxu0 0.0
    %89 = vmatprep.subr.mxu0 0.0
    %90 = vmatpush1.msra.mxu0 0.0
    %91 = vmatprep.subr.mxu0 0.0
    %92 = vmatpush1.msra.mxu0 0.0
    %93 = vmatprep.subr.mxu0 0.0
    %94 = vmatpush1.msra.mxu0 0.0
    %95 = vmatprep.subr.mxu0 0.0
    %96 = vmatpush1.msra.mxu0 0.0
    %97 = vmatprep.subr.mxu0 0.0
    %98 = vmatpush1.msra.mxu0 0.0
    %99 = vmatprep.subr.mxu0 0.0
    %100 = vmatpush1.msra.mxu0 0.0
    %101 = vmatprep.subr.mxu0 0.0
    %102 = vmatpush1.msra.mxu0 0.0
    %103 = vmatprep.subr.mxu0 0.0
    %104 = vmatpush1.msra.mxu0 0.0
    %105 = vmatprep.mubr.f32.mxu0 0.0
    %106 = vmatmul.mubr.f32.gmra.mrb[0].mxu0 %v36
    %v107 = vpop.f32.mrb[0].mxu0
    %v108 = vadd.f32 %v32, %v107
    %v109 = vpop.f32.mrb[0].mxu0
    %110 = vmatprep.mubr.f32.mxu0 0.0
    %111 = vmatmul.mubr.f32.gmra.mrb[0].mxu0 %v39
    %v112 = vpop.f32.mrb[0].mxu0
    %v113 = vadd.f32 %v32, %v112
    %v114 = vpop.f32.mrb[0].mxu0
    %115 = vdwg.mxu0
    %v116 = vmax.f32 %v108, 0.0
    %v117 = vmax.f32 %v113, 0.0
    %v118 = vld [vmem:[%s3] sm:$0xff]
    %v119 = vld [vmem:[%s3 + $0x8] sm:$0xff]
    %v120 = vld [vmem:[%s3 + $0x10] sm:$0xff]
    %v121 = vld [vmem:[%s3 + $0x18] sm:$0xff]
    %v122 = vld [vmem:[%s3 + $0x20] sm:$0xff]
    %v123 = vld [vmem:[%s3 + $0x28] sm:$0xff]
    %v124 = vld [vmem:[%s3 + $0x30] sm:$0xff]
    %v125 = vld [vmem:[%s3 + $0x38] sm:$0xff]
    %v126 = vld [vmem:[%s3 + $0x40] sm:$0xff]
    %v127 = vld [vmem:[%s3 + $0x48] sm:$0xff]
    %v128 = vld [vmem:[%s3 + $0x50] sm:$0xff]
    %v129 = vld [vmem:[%s3 + $0x58] sm:$0xff]
    %v130 = vld [vmem:[%s3 + $0x60] sm:$0xff]
    %v131 = vld [vmem:[%s3 + $0x68] sm:$0xff]
    %v132 = vld [vmem:[%s3 + $0x70] sm:$0xff]
    %v133 = vld [vmem:[%s3 + $0x78] sm:$0xff]
    %v134 = vld [vmem:[%s4] sm:$0x1]
    %v136 = vlaneseq
    %v137 = vshrl.u32 %v136, 7
    %v138 = vsub.s32 0, %v137
    %v139 = vrot.slane %v134, %v138
    %141 = vmatprep.subr.mxu0 0.0
    %142 = vmatpush1.msra.mxu0 %v118
    %143 = vmatprep.subr.mxu0 0.0
    %144 = vmatpush1.msra.mxu0 %v119
    %145 = vmatprep.subr.mxu0 0.0
    %146 = vmatpush1.msra.mxu0 %v120
    %147 = vmatprep.subr.mxu0 0.0
    %148 = vmatpush1.msra.mxu0 %v121
    %149 = vmatprep.subr.mxu0 0.0
    %150 = vmatpush1.msra.mxu0 %v122
    %151 = vmatprep.subr.mxu0 0.0
    %152 = vmatpush1.msra.mxu0 %v123
    %153 = vmatprep.subr.mxu0 0.0
    %154 = vmatpush1.msra.mxu0 %v124
    %155 = vmatprep.subr.mxu0 0.0
    %156 = vmatpush1.msra.mxu0 %v125
    %157 = vmatprep.subr.mxu0 0.0
    %158 = vmatpush1.msra.mxu0 %v126
    %159 = vmatprep.subr.mxu0 0.0
    %160 = vmatpush1.msra.mxu0 %v127
    %161 = vmatprep.subr.mxu0 0.0
    %162 = vmatpush1.msra.mxu0 %v128
    %163 = vmatprep.subr.mxu0 0.0
    %164 = vmatpush1.msra.mxu0 %v129
    %165 = vmatprep.subr.mxu0 0.0
    %166 = vmatpush1.msra.mxu0 %v130
    %167 = vmatprep.subr.mxu0 0.0
    %168 = vmatpush1.msra.mxu0 %v131
    %169 = vmatprep.subr.mxu0 0.0
    %170 = vmatpush1.msra.mxu0 %v132
    %171 = vmatprep.subr.mxu0 0.0
    %172 = vmatpush1.msra.mxu0 %v133
    %173 = vmatprep.subr.mxu0 0.0
    %174 = vmatpush1.msra.mxu0 0.0
    %175 = vmatprep.subr.mxu0 0.0
    %176 = vmatpush1.msra.mxu0 0.0
    %177 = vmatprep.subr.mxu0 0.0
    %178 = vmatpush1.msra.mxu0 0.0
    %179 = vmatprep.subr.mxu0 0.0
    %180 = vmatpush1.msra.mxu0 0.0
    %181 = vmatprep.subr.mxu0 0.0
    %182 = vmatpush1.msra.mxu0 0.0
    %183 = vmatprep.subr.mxu0 0.0
    %184 = vmatpush1.msra.mxu0 0.0
    %185 = vmatprep.subr.mxu0 0.0
    %186 = vmatpush1.msra.mxu0 0.0
    %187 = vmatprep.subr.mxu0 0.0
    %188 = vmatpush1.msra.mxu0 0.0
    %189 = vmatprep.subr.mxu0 0.0
    %190 = vmatpush1.msra.mxu0 0.0
    %191 = vmatprep.subr.mxu0 0.0
    %192 = vmatpush1.msra.mxu0 0.0
    %193 = vmatprep.subr.mxu0 0.0
    %194 = vmatpush1.msra.mxu0 0.0
    %195 = vmatprep.subr.mxu0 0.0
    %196 = vmatpush1.msra.mxu0 0.0
    %197 = vmatprep.subr.mxu0 0.0
    %198 = vmatpush1.msra.mxu0 0.0
    %199 = vmatprep.subr.mxu0 0.0
    %200 = vmatpush1.msra.mxu0 0.0
    %201 = vmatprep.subr.mxu0 0.0
    %202 = vmatpush1.msra.mxu0 0.0
    %203 = vmatprep.subr.mxu0 0.0
    %204 = vmatpush1.msra.mxu0 0.0
    %205 = vmatprep.mubr.f32.mxu0 0.0
    %206 = vmatmul.mubr.f32.gmra.mrb[0].mxu0 %v116
    %v207 = vpop.f32.mrb[0].mxu0
    %v208 = vadd.f32 %v139, %v207
    %v209 = vpop.f32.mrb[0].mxu0
    %210 = vmatprep.mubr.f32.mxu0 0.0
    %211 = vmatmul.mubr.f32.gmra.mrb[0].mxu0 %v117
    %v212 = vpop.f32.mrb[0].mxu0
    %v213 = vadd.f32 %v139, %v212
    %v214 = vpop.f32.mrb[0].mxu0
    %215 = vdwg.mxu0
    %216 = vst.msk [vmem:[#allocation2] sm:$0xff] %vm34, %v208
    %217 = vst.msk [vmem:[#allocation2 + $0x8] sm:$0xff] %vm34, %v213
    // Predicated region
    $region22: #{scaled_model_forward.1} parent=1 // pred_check
      _
    $region23: #{scaled_model_forward.1} parent=1 // pred_check_branch
      %219 = sbr.rel (0) target = $region25
    $region24: #{scaled_model_forward.1} parent=1 // pred_region
      %s221 = ssub.s32 256, 256
      %222 = vsyncadd [#allocation3], %s221
      %s223 = sshll.u32 [#allocation2], 4
      %s224 = int_to_ptr.vmem [resolvable:$true] %s223
      %229 = dma.vmem_to_hbm [thread:$0]  %s224, 256, %s5, [#allocation3], 128, 128, 8
    $region25: #{scaled_model_forward.1} parent=1 // pred_fallthru
      _
    // Predicated region
    $region26: #{scaled_model_forward.1} parent=1 // pred_check
      _
    $region27: #{scaled_model_forward.1} parent=1 // pred_check_branch
      %231 = sbr.rel (0) target = $region29
    $region28: #{scaled_model_forward.1} parent=1 // pred_region
      %232 = dma.done [#allocation3], 256
    $region29: #{scaled_model_forward.1} parent=1 // pred_fallthru
      _
    %233 = vsyncpa [#allocation3], 1

</llo_original>
